<compile_context>
chip_gen: v5e
topology: v5e:2x2
jax: 0.10.0
libtpu: 0.0.40
codegen_flags: <defaults>
</compile_context>

<pallas_src>
import numpy as np
import jax
import jax.numpy as jnp
from jax import lax
from jax.experimental import pallas as pl
from jax.experimental.pallas import tpu as pltpu

# ---- small synthetic configuration (waveglow defaults 1024/256/1024 scaled by 8) ----
FILTER_LEN = 128                      # filter_length
HOP = 32                              # hop_length
WIN_LEN = 128                         # win_length
CUTOFF = FILTER_LEN // 2 + 1          # 65 frequency bins
CPAD = 128                            # cutoff zero-padded to a full lane group
R = FILTER_LEN // HOP                 # 4 hop phases (== n_overlap)
BATCH = 2
NUM_SAMPLES = 256                     # multiple of HOP
N_FRAMES = NUM_SAMPLES // HOP + 1     # 9
PADDED_LEN = NUM_SAMPLES + FILTER_LEN # 384 (reflect-padded length == conv_transpose output)
N_CHUNKS = PADDED_LEN // FILTER_LEN   # 3 lane-dense 128-sample output chunks
ROWS_PER_B = N_CHUNKS + 1             # 4 (one pad row per batch to keep 8-row blocks)
Y_ROWS = BATCH * ROWS_PER_B           # 8 output rows (exactly one sublane group)


def _hann_periodic(n):
    return 0.5 - 0.5 * np.cos(2.0 * np.pi * np.arange(n) / n)


def build_params():
    """Deterministic parameter/buffer construction (mirrors STFT.__init__)."""
    scale = FILTER_LEN / HOP
    fourier = np.fft.fft(np.eye(FILTER_LEN))
    fb = np.vstack([np.real(fourier[:CUTOFF]), np.imag(fourier[:CUTOFF])])   # (2C, F)
    inv_b = np.linalg.pinv(scale * fb).T                                     # (2C, F)
    win = _hann_periodic(WIN_LEN)        # win_length == filter_length -> no pad_center
    fwd = (fb * win[None, :]).astype(np.float32)                             # (2C, F)
    inv = (inv_b * win[None, :]).astype(np.float32)                          # (2C, F)

    # fused forward basis (F, 2*CPAD): columns [0:65] real, [128:193] imag, rest zero.
    fb_fused = np.zeros((FILTER_LEN, 2 * CPAD), np.float32)
    fb_fused[:, :CUTOFF] = fwd[:CUTOFF].T
    fb_fused[:, CPAD:CPAD + CUTOFF] = fwd[CUTOFF:].T

    # inverse basis with rows padded to 2*CPAD.
    inv_pad = np.zeros((2 * CPAD, FILTER_LEN), np.float32)
    inv_pad[:CUTOFF] = inv[:CUTOFF]
    inv_pad[CPAD:CPAD + CUTOFF] = inv[CUTOFF:]

    # "placed" inverse bases, one per hop phase j: a frame with start offset 32*j inside
    # a 128-sample chunk writes columns [32j, 32j+128) of a 256-wide row; columns >= 128
    # are the overflow into the next chunk.
    inv_shift = np.zeros((R, 2 * CPAD, 2 * FILTER_LEN), np.float32)
    for j in range(R):
        inv_shift[j, :, j * HOP:j * HOP + FILTER_LEN] = inv_pad

    # frame selection/placement matrix: row (8j + 4b + q) picks frame t = 4q + j of
    # batch b (i.e. the frame whose start lies in output chunk q with hop-phase j).
    sel = np.zeros((R * Y_ROWS, BATCH * N_FRAMES), np.float32)
    for j in range(R):
        for b in range(BATCH):
            for q in range(N_CHUNKS):
                t = R * q + j
                if t < N_FRAMES:
                    sel[Y_ROWS * j + ROWS_PER_B * b + q, N_FRAMES * b + t] = 1.0

    # chunk-overflow shift: the ">=128" half of a row is added to the next chunk row
    # of the same batch element (overflow out of the last chunk is provably zero).
    dsh = np.zeros((Y_ROWS, Y_ROWS), np.float32)
    for b in range(BATCH):
        for q in range(N_CHUNKS - 1):
            dsh[ROWS_PER_B * b + q + 1, ROWS_PER_B * b + q] = 1.0

    # librosa window_sumsquare + (filter_length / hop_length) scale, folded together,
    # laid out in the same (Y_ROWS, 128) chunk-blocked layout as the kernel output.
    win_sq = _hann_periodic(WIN_LEN) ** 2
    ws = np.zeros(PADDED_LEN, np.float32)
    for t in range(N_FRAMES):
        ws[t * HOP:t * HOP + FILTER_LEN] += win_sq
    tiny = np.finfo(np.float32).tiny
    norm_flat = (np.where(ws > tiny, 1.0 / ws, 1.0) * scale).astype(np.float32)
    norm8 = np.zeros((Y_ROWS, FILTER_LEN), np.float32)
    for b in range(BATCH):
        for q in range(N_CHUNKS):
            norm8[ROWS_PER_B * b + q] = norm_flat[q * FILTER_LEN:(q + 1) * FILTER_LEN]

    # TODO(synk): the real module derives bias_spec by running the vocoder on a zero
    # mel-spectrogram and taking the first STFT frame; we substitute a deterministic
    # synthetic non-negative magnitude buffer of the same shape.
    bias = (np.abs(np.asarray(jax.random.normal(jax.random.PRNGKey(1), (1, CUTOFF))))
            * 0.5).astype(np.float32)
    bias_pad = np.zeros((1, CPAD), np.float32)
    bias_pad[:, :CUTOFF] = bias

    to_j = lambda a: jnp.asarray(a, jnp.float32)
    return dict(fb_fused=to_j(fb_fused), bias_pad=to_j(bias_pad),
                sel=to_j(sel), inv_shift=to_j(inv_shift), dsh=to_j(dsh),
                norm8=to_j(norm8),
                # plain-JAX reference params
                fwd_full=to_j(fwd), inv_full=to_j(inv), bias=to_j(bias),
                norm_flat=to_j(norm_flat))


def _denoiser_kernel(strength_ref, frames_ref, fb_ref, bias_ref, sel_ref,
                     inv_ref, dsh_ref, norm_ref, out_ref):
    frames = frames_ref[...]                                                 # (B*NF, 128)
    # STFT == strided conv1d with the Fourier basis -> ONE fused MXU matmul.
    spec = jnp.dot(frames, fb_ref[...], preferred_element_type=jnp.float32)  # (B*NF, 256)
    real = spec[:, :CPAD]                       # 128-lane aligned slice (free)
    imag = spec[:, CPAD:]
    s = real * real + imag * imag
    # rsqrt (EUP) with a tiny floor replaces sqrt + divide + where; at s ~ 0 both
    # real/imag are ~0 so rec stays 0 (matches clamp(mag - bias*s, 0) * e^{i*phase}).
    inv_mag = lax.rsqrt(jnp.maximum(s, np.finfo(np.float32).tiny))
    strength = strength_ref[0, 0]
    factor = jnp.maximum(1.0 - strength * bias_ref[...] * inv_mag, 0.0)
    rec = jnp.concatenate([real * factor, imag * factor], axis=1)            # (B*NF, 256)

    # iSTFT + overlap-add:
    #   g[8j + 4b + q]   = rec of the frame with hop-phase j landing in chunk q
    #   g_j @ inv_shift_j = that frame's 128 samples placed at lane offset 32j,
    #                       columns >=128 spilling into the next chunk.
    g = jnp.dot(sel_ref[...], rec, preferred_element_type=jnp.float32)       # (4*8, 256)
    low = jnp.zeros((Y_ROWS, FILTER_LEN), jnp.float32)
    high = jnp.zeros((Y_ROWS, FILTER_LEN), jnp.float32)
    for j in range(R):                                                       # static unroll
        pj = jnp.dot(g[Y_ROWS * j:Y_ROWS * (j + 1), :], inv_ref[j],
                     preferred_element_type=jnp.float32)                     # (8, 256)
        low = low + pj[:, :FILTER_LEN]
        high = high + pj[:, FILTER_LEN:]
    y = low + jnp.dot(dsh_ref[...], high, preferred_element_type=jnp.float32)
    # window_sumsquare normalisation; lane-dense (8, 128) unmasked store.
    out_ref[...] = (y * norm_ref[...]).astype(out_ref.dtype)


def denoiser_forward(audio, params, strength=0.1):
    B, T = audio.shape
    assert B == BATCH and T == NUM_SAMPLES
    pad = FILTER_LEN // 2
    padded = jnp.pad(audio, ((0, 0), (pad, pad)), mode="reflect")   # torch F.pad reflect
    idx = jnp.arange(N_FRAMES)[:, None] * HOP + jnp.arange(FILTER_LEN)[None, :]
    frames = padded[:, idx].astype(jnp.float32).reshape(B * N_FRAMES, FILTER_LEN)
    strength_arr = jnp.full((1, 1), strength, jnp.float32)

    def full_spec(shape):
        return pl.BlockSpec(shape, lambda i, _s=shape: (0,) * len(_s))

    out_rows = pl.pallas_call(
        _denoiser_kernel,
        out_shape=jax.ShapeDtypeStruct((Y_ROWS, FILTER_LEN), jnp.float32),
        grid=(1,),                                   # whole batch in one invocation
        in_specs=[
            pl.BlockSpec(memory_space=pltpu.MemorySpace.SMEM),        # strength scalar
            full_spec((B * N_FRAMES, FILTER_LEN)),                    # framed audio
            full_spec((FILTER_LEN, 2 * CPAD)),                        # fused fwd basis
            full_spec((1, CPAD)),                                     # bias_spec (padded)
            full_spec((R * Y_ROWS, B * N_FRAMES)),                    # frame placement
            full_spec((R, 2 * CPAD, 2 * FILTER_LEN)),                 # placed inv bases
            full_spec((Y_ROWS, Y_ROWS)),                              # chunk overflow shift
            full_spec((Y_ROWS, FILTER_LEN)),                          # window norm
        ],
        out_specs=full_spec((Y_ROWS, FILTER_LEN)),
        compiler_params=pltpu.CompilerParams(dimension_semantics=("arbitrary",)),
    )(strength_arr, frames, params["fb_fused"], params["bias_pad"],
      params["sel"], params["inv_shift"], params["dsh"], params["norm8"])

    # (8, 128) rows -> (B, 4, 128) -> drop pad row -> (B, 384) -> strip reflect pad.
    y = out_rows.reshape(B, ROWS_PER_B, FILTER_LEN)[:, :N_CHUNKS, :].reshape(B, PADDED_LEN)
    y = y[:, pad:PADDED_LEN - pad]
    return y[:, None, :]   # (B, 1, T) — matches PyTorch stft.inverse output layout


def reference_forward(audio, params, strength=0.1):
    """Plain-JAX reference mirroring the PyTorch math (for a sanity check)."""
    pad = FILTER_LEN // 2
    padded = jnp.pad(audio, ((0, 0), (pad, pad)), mode="reflect")
    idx = jnp.arange(N_FRAMES)[:, None] * HOP + jnp.arange(FILTER_LEN)[None, :]
    frames = padded[:, idx].astype(jnp.float32)
    ft = jnp.einsum("btf,cf->btc", frames, params["fwd_full"])
    real, imag = ft[..., :CUTOFF], ft[..., CUTOFF:]
    mag = jnp.sqrt(real * real + imag * imag)
    phase = jnp.arctan2(imag, real)
    den = jnp.clip(mag - params["bias"][None] * strength, 0.0, None)
    rec = jnp.concatenate([den * jnp.cos(phase), den * jnp.sin(phase)], axis=-1)
    fo = jnp.einsum("btc,cf->btf", rec, params["inv_full"])
    y = jnp.zeros((audio.shape[0], PADDED_LEN), jnp.float32)
    for t in range(N_FRAMES):
        y = y.at[:, t * HOP:t * HOP + FILTER_LEN].add(fo[:, t])
    y = y * params["norm_flat"][None]
    return y[:, pad:PADDED_LEN - pad][:, None, :]


if __name__ == "__main__":
    params = build_params()
    key = jax.random.PRNGKey(0)
    audio = jax.random.normal(key, (BATCH, NUM_SAMPLES), jnp.float32)

    out = denoiser_forward(audio, params, strength=0.1)
    out = jax.block_until_ready(out)

    assert out.shape == (BATCH, 1, NUM_SAMPLES)
    assert bool(jnp.all(jnp.isfinite(out)))
    ref = reference_forward(audio, params, strength=0.1)
    np.testing.assert_allclose(np.asarray(out), np.asarray(ref), rtol=2e-2, atol=2e-2)

    print("KERNEL_OK")
</pallas_src>

<mosaic_0001>
module attributes {stable_mosaic.version = 11 : i64} {
  func.func @_denoiser_kernel(%arg0: i32, %arg1: memref<1x1xf32, #tpu.memory_space<smem>>, %arg2: memref<18x128xf32, #tpu.memory_space<vmem>>, %arg3: memref<128x256xf32, #tpu.memory_space<vmem>>, %arg4: memref<1x128xf32, #tpu.memory_space<vmem>>, %arg5: memref<32x18xf32, #tpu.memory_space<vmem>>, %arg6: memref<4x256x256xf32, #tpu.memory_space<vmem>>, %arg7: memref<8x8xf32, #tpu.memory_space<vmem>>, %arg8: memref<8x128xf32, #tpu.memory_space<vmem>>, %arg9: memref<8x128xf32, #tpu.memory_space<vmem>>) attributes {dimension_semantics = [#tpu.dimension_semantics<arbitrary>], iteration_bounds = array<i64: 1>, scalar_prefetch = 0 : i64, scratch_operands = 0 : i64, tpu.core_type = #tpu.core_type<tc>, window_params = [{transform_indices = @transform_0, window_bounds = array<i64: 1, 1>}, {pipeline_mode = #tpu.pipeline_mode<synchronous>, transform_indices = @transform_1, window_bounds = array<i64: 18, 128>}, {pipeline_mode = #tpu.pipeline_mode<synchronous>, transform_indices = @transform_2, window_bounds = array<i64: 128, 256>}, {pipeline_mode = #tpu.pipeline_mode<synchronous>, transform_indices = @transform_3, window_bounds = array<i64: 1, 128>}, {pipeline_mode = #tpu.pipeline_mode<synchronous>, transform_indices = @transform_4, window_bounds = array<i64: 32, 18>}, {pipeline_mode = #tpu.pipeline_mode<synchronous>, transform_indices = @transform_5, window_bounds = array<i64: 4, 256, 256>}, {pipeline_mode = #tpu.pipeline_mode<synchronous>, transform_indices = @transform_6, window_bounds = array<i64: 8, 8>}, {pipeline_mode = #tpu.pipeline_mode<synchronous>, transform_indices = @transform_7, window_bounds = array<i64: 8, 128>}, {pipeline_mode = #tpu.pipeline_mode<synchronous>, transform_indices = @transform_8, window_bounds = array<i64: 8, 128>}]} {
    %c0 = arith.constant 0 : index
    %c0_0 = arith.constant 0 : index
    %0 = vector.load %arg2[%c0, %c0_0] : memref<18x128xf32, #tpu.memory_space<vmem>>, vector<18x128xf32>
    %c0_1 = arith.constant 0 : index
    %c0_2 = arith.constant 0 : index
    %1 = vector.load %arg3[%c0_1, %c0_2] : memref<128x256xf32, #tpu.memory_space<vmem>>, vector<128x256xf32>
    %cst = arith.constant dense<0.000000e+00> : vector<18x256xf32>
    %2 = tpu.matmul %0, %1, %cst {dimension_numbers = #tpu.dot_dimension_numbers<[1], [0], [0], [1], [0, 0, 1, 1], [], []>} : vector<18x128xf32>, vector<128x256xf32>, vector<18x256xf32> -> vector<18x256xf32>
    %3 = vector.extract_strided_slice %2 {offsets = [0, 0], sizes = [18, 128], strides = [1, 1]} : vector<18x256xf32> to vector<18x128xf32>
    %4 = vector.extract_strided_slice %2 {offsets = [0, 128], sizes = [18, 128], strides = [1, 1]} : vector<18x256xf32> to vector<18x128xf32>
    %5 = arith.mulf %3, %3 : vector<18x128xf32>
    %6 = arith.mulf %4, %4 : vector<18x128xf32>
    %7 = arith.addf %5, %6 : vector<18x128xf32>
    %cst_3 = arith.constant 1.17549435E-38 : f32
    %8 = vector.broadcast %cst_3 : f32 to vector<18x128xf32>
    %9 = arith.maximumf %7, %8 : vector<18x128xf32>
    %10 = math.rsqrt %9 : vector<18x128xf32>
    %c0_4 = arith.constant 0 : index
    %c0_5 = arith.constant 0 : index
    %11 = memref.load %arg1[%c0_4, %c0_5] : memref<1x1xf32, #tpu.memory_space<smem>>
    %c0_6 = arith.constant 0 : index
    %c0_7 = arith.constant 0 : index
    %12 = vector.load %arg4[%c0_6, %c0_7] : memref<1x128xf32, #tpu.memory_space<vmem>>, vector<1x128xf32>
    %13 = vector.broadcast %11 : f32 to vector<1x128xf32>
    %14 = arith.mulf %13, %12 : vector<1x128xf32>
    %15 = vector.broadcast %14 : vector<1x128xf32> to vector<18x128xf32>
    %16 = arith.mulf %15, %10 : vector<18x128xf32>
    %cst_8 = arith.constant 1.000000e+00 : f32
    %17 = vector.broadcast %cst_8 : f32 to vector<18x128xf32>
    %18 = arith.subf %17, %16 : vector<18x128xf32>
    %cst_9 = arith.constant 0.000000e+00 : f32
    %19 = vector.broadcast %cst_9 : f32 to vector<18x128xf32>
    %20 = arith.maximumf %18, %19 : vector<18x128xf32>
    %21 = arith.mulf %3, %20 : vector<18x128xf32>
    %22 = arith.mulf %4, %20 : vector<18x128xf32>
    %23 = tpu.concatenate %21, %22 in 1 : vector<18x128xf32>, vector<18x128xf32> -> vector<18x256xf32>
    %c0_10 = arith.constant 0 : index
    %c0_11 = arith.constant 0 : index
    %24 = vector.load %arg5[%c0_10, %c0_11] : memref<32x18xf32, #tpu.memory_space<vmem>>, vector<32x18xf32>
    %cst_12 = arith.constant dense<0.000000e+00> : vector<32x256xf32>
    %25 = tpu.matmul %24, %23, %cst_12 {dimension_numbers = #tpu.dot_dimension_numbers<[1], [0], [0], [1], [0, 0, 1, 1], [], []>} : vector<32x18xf32>, vector<18x256xf32>, vector<32x256xf32> -> vector<32x256xf32>
    %cst_13 = arith.constant 0.000000e+00 : f32
    %26 = vector.broadcast %cst_13 : f32 to vector<8x128xf32>
    %cst_14 = arith.constant 0.000000e+00 : f32
    %27 = vector.broadcast %cst_14 : f32 to vector<8x128xf32>
    %28 = vector.extract_strided_slice %25 {offsets = [0, 0], sizes = [8, 256], strides = [1, 1]} : vector<32x256xf32> to vector<8x256xf32>
    %c0_15 = arith.constant 0 : index
    %c0_16 = arith.constant 0 : index
    %c0_17 = arith.constant 0 : index
    %29 = vector.load %arg6[%c0_15, %c0_16, %c0_17] : memref<4x256x256xf32, #tpu.memory_space<vmem>>, vector<1x256x256xf32>
    %30 = vector.shape_cast %29 : vector<1x256x256xf32> to vector<256x256xf32>
    %cst_18 = arith.constant dense<0.000000e+00> : vector<8x256xf32>
    %31 = tpu.matmul %28, %30, %cst_18 {dimension_numbers = #tpu.dot_dimension_numbers<[1], [0], [0], [1], [0, 0, 1, 1], [], []>} : vector<8x256xf32>, vector<256x256xf32>, vector<8x256xf32> -> vector<8x256xf32>
    %32 = vector.extract_strided_slice %31 {offsets = [0, 0], sizes = [8, 128], strides = [1, 1]} : vector<8x256xf32> to vector<8x128xf32>
    %33 = arith.addf %26, %32 : vector<8x128xf32>
    %34 = vector.extract_strided_slice %31 {offsets = [0, 128], sizes = [8, 128], strides = [1, 1]} : vector<8x256xf32> to vector<8x128xf32>
    %35 = arith.addf %27, %34 : vector<8x128xf32>
    %36 = vector.extract_strided_slice %25 {offsets = [8, 0], sizes = [8, 256], strides = [1, 1]} : vector<32x256xf32> to vector<8x256xf32>
    %c1 = arith.constant 1 : index
    %c0_19 = arith.constant 0 : index
    %c0_20 = arith.constant 0 : index
    %37 = vector.load %arg6[%c1, %c0_19, %c0_20] : memref<4x256x256xf32, #tpu.memory_space<vmem>>, vector<1x256x256xf32>
    %38 = vector.shape_cast %37 : vector<1x256x256xf32> to vector<256x256xf32>
    %cst_21 = arith.constant dense<0.000000e+00> : vector<8x256xf32>
    %39 = tpu.matmul %36, %38, %cst_21 {dimension_numbers = #tpu.dot_dimension_numbers<[1], [0], [0], [1], [0, 0, 1, 1], [], []>} : vector<8x256xf32>, vector<256x256xf32>, vector<8x256xf32> -> vector<8x256xf32>
    %40 = vector.extract_strided_slice %39 {offsets = [0, 0], sizes = [8, 128], strides = [1, 1]} : vector<8x256xf32> to vector<8x128xf32>
    %41 = arith.addf %33, %40 : vector<8x128xf32>
    %42 = vector.extract_strided_slice %39 {offsets = [0, 128], sizes = [8, 128], strides = [1, 1]} : vector<8x256xf32> to vector<8x128xf32>
    %43 = arith.addf %35, %42 : vector<8x128xf32>
    %44 = vector.extract_strided_slice %25 {offsets = [16, 0], sizes = [8, 256], strides = [1, 1]} : vector<32x256xf32> to vector<8x256xf32>
    %c2 = arith.constant 2 : index
    %c0_22 = arith.constant 0 : index
    %c0_23 = arith.constant 0 : index
    %45 = vector.load %arg6[%c2, %c0_22, %c0_23] : memref<4x256x256xf32, #tpu.memory_space<vmem>>, vector<1x256x256xf32>
    %46 = vector.shape_cast %45 : vector<1x256x256xf32> to vector<256x256xf32>
    %cst_24 = arith.constant dense<0.000000e+00> : vector<8x256xf32>
    %47 = tpu.matmul %44, %46, %cst_24 {dimension_numbers = #tpu.dot_dimension_numbers<[1], [0], [0], [1], [0, 0, 1, 1], [], []>} : vector<8x256xf32>, vector<256x256xf32>, vector<8x256xf32> -> vector<8x256xf32>
    %48 = vector.extract_strided_slice %47 {offsets = [0, 0], sizes = [8, 128], strides = [1, 1]} : vector<8x256xf32> to vector<8x128xf32>
    %49 = arith.addf %41, %48 : vector<8x128xf32>
    %50 = vector.extract_strided_slice %47 {offsets = [0, 128], sizes = [8, 128], strides = [1, 1]} : vector<8x256xf32> to vector<8x128xf32>
    %51 = arith.addf %43, %50 : vector<8x128xf32>
    %52 = vector.extract_strided_slice %25 {offsets = [24, 0], sizes = [8, 256], strides = [1, 1]} : vector<32x256xf32> to vector<8x256xf32>
    %c3 = arith.constant 3 : index
    %c0_25 = arith.constant 0 : index
    %c0_26 = arith.constant 0 : index
    %53 = vector.load %arg6[%c3, %c0_25, %c0_26] : memref<4x256x256xf32, #tpu.memory_space<vmem>>, vector<1x256x256xf32>
    %54 = vector.shape_cast %53 : vector<1x256x256xf32> to vector<256x256xf32>
    %cst_27 = arith.constant dense<0.000000e+00> : vector<8x256xf32>
    %55 = tpu.matmul %52, %54, %cst_27 {dimension_numbers = #tpu.dot_dimension_numbers<[1], [0], [0], [1], [0, 0, 1, 1], [], []>} : vector<8x256xf32>, vector<256x256xf32>, vector<8x256xf32> -> vector<8x256xf32>
    %56 = vector.extract_strided_slice %55 {offsets = [0, 0], sizes = [8, 128], strides = [1, 1]} : vector<8x256xf32> to vector<8x128xf32>
    %57 = arith.addf %49, %56 : vector<8x128xf32>
    %58 = vector.extract_strided_slice %55 {offsets = [0, 128], sizes = [8, 128], strides = [1, 1]} : vector<8x256xf32> to vector<8x128xf32>
    %59 = arith.addf %51, %58 : vector<8x128xf32>
    %c0_28 = arith.constant 0 : index
    %c0_29 = arith.constant 0 : index
    %60 = vector.load %arg7[%c0_28, %c0_29] : memref<8x8xf32, #tpu.memory_space<vmem>>, vector<8x8xf32>
    %cst_30 = arith.constant dense<0.000000e+00> : vector<8x128xf32>
    %61 = tpu.matmul %60, %59, %cst_30 {dimension_numbers = #tpu.dot_dimension_numbers<[1], [0], [0], [1], [0, 0, 1, 1], [], []>} : vector<8x8xf32>, vector<8x128xf32>, vector<8x128xf32> -> vector<8x128xf32>
    %62 = arith.addf %57, %61 : vector<8x128xf32>
    %c0_31 = arith.constant 0 : index
    %c0_32 = arith.constant 0 : index
    %63 = vector.load %arg8[%c0_31, %c0_32] : memref<8x128xf32, #tpu.memory_space<vmem>>, vector<8x128xf32>
    %64 = arith.mulf %62, %63 : vector<8x128xf32>
    %c0_33 = arith.constant 0 : index
    %c0_34 = arith.constant 0 : index
    %65 = vector.load %arg9[%c0_33, %c0_34] : memref<8x128xf32, #tpu.memory_space<vmem>>, vector<8x128xf32>
    tpu.vector_store %arg9[%c0_33, %c0_34], %64 {strides = array<i32>} : memref<8x128xf32, #tpu.memory_space<vmem>>, vector<8x128xf32>,
    return
  }
  func.func @transform_0(%arg0: i32) -> (i32, i32) {
    %c0_i32 = arith.constant 0 : i32
    %c0_i32_0 = arith.constant 0 : i32
    %c0_i32_1 = arith.constant 0 : i32
    return %c0_i32, %c0_i32_0 : i32, i32
  }
  func.func @transform_1(%arg0: i32) -> (i32, i32) {
    %c0_i32 = arith.constant 0 : i32
    %c0_i32_0 = arith.constant 0 : i32
    %c0_i32_1 = arith.constant 0 : i32
    return %c0_i32, %c0_i32_0 : i32, i32
  }
  func.func @transform_2(%arg0: i32) -> (i32, i32) {
    %c0_i32 = arith.constant 0 : i32
    %c0_i32_0 = arith.constant 0 : i32
    %c0_i32_1 = arith.constant 0 : i32
    return %c0_i32, %c0_i32_0 : i32, i32
  }
  func.func @transform_3(%arg0: i32) -> (i32, i32) {
    %c0_i32 = arith.constant 0 : i32
    %c0_i32_0 = arith.constant 0 : i32
    %c0_i32_1 = arith.constant 0 : i32
    return %c0_i32, %c0_i32_0 : i32, i32
  }
  func.func @transform_4(%arg0: i32) -> (i32, i32) {
    %c0_i32 = arith.constant 0 : i32
    %c0_i32_0 = arith.constant 0 : i32
    %c0_i32_1 = arith.constant 0 : i32
    return %c0_i32, %c0_i32_0 : i32, i32
  }
  func.func @transform_5(%arg0: i32) -> (i32, i32, i32) {
    %c0_i32 = arith.constant 0 : i32
    %c0_i32_0 = arith.constant 0 : i32
    %c0_i32_1 = arith.constant 0 : i32
    %c0_i32_2 = arith.constant 0 : i32
    return %c0_i32, %c0_i32_0, %c0_i32_1 : i32, i32, i32
  }
  func.func @transform_6(%arg0: i32) -> (i32, i32) {
    %c0_i32 = arith.constant 0 : i32
    %c0_i32_0 = arith.constant 0 : i32
    %c0_i32_1 = arith.constant 0 : i32
    return %c0_i32, %c0_i32_0 : i32, i32
  }
  func.func @transform_7(%arg0: i32) -> (i32, i32) {
    %c0_i32 = arith.constant 0 : i32
    %c0_i32_0 = arith.constant 0 : i32
    %c0_i32_1 = arith.constant 0 : i32
    return %c0_i32, %c0_i32_0 : i32, i32
  }
  func.func @transform_8(%arg0: i32) -> (i32, i32) {
    %c0_i32 = arith.constant 0 : i32
    %c0_i32_0 = arith.constant 0 : i32
    %c0_i32_1 = arith.constant 0 : i32
    return %c0_i32, %c0_i32_0 : i32, i32
  }
}

</mosaic_0001>

<llo_original>
// kernel: tpu_custom_call.1
$region0: #{tpu_custom_call.1}
  #allocation0 [shape = 'u32[]', space=smem, size = 0x4, offset = 0x4, fixed_abs, tag = 'smem constant byte address 0x4 - core index']
  #allocation1 [shape = 'u32[72,128]{1,0:T(1,128)}', space=vmem, size = 0x9000, scoped, tag = 'internal scratch']
  #allocation2 [shape = 'f32[1,1]{1,0:T(1,128)S(6)}', space=smem, size = 0x200, scoped, tag = 'scoped memory for tpu_custom_call.1']
  %s0 = inlined_call_operand.<no memory space> [shape: f32[1,1], index: 0, kind: input, shape index: {}]
  %s1 = inlined_call_operand.vmem [shape: f32[18,128], index: 1, kind: input, shape index: {}]
  %s2 = inlined_call_operand.hbm [shape: f32[128,256], index: 2, kind: input, shape index: {}]
  %s3 = inlined_call_operand.vmem [shape: f32[1,128], index: 3, kind: input, shape index: {}]
  %s4 = inlined_call_operand.vmem [shape: f32[32,18], index: 4, kind: input, shape index: {}]
  %s5 = inlined_call_operand.hbm [shape: f32[4,256,256], index: 5, kind: input, shape index: {}]
  %s6 = inlined_call_operand.vmem [shape: f32[8,8], index: 6, kind: input, shape index: {}]
  %s7 = inlined_call_operand.vmem [shape: f32[8,128], index: 7, kind: input, shape index: {}]
  %s8 = inlined_call_operand.hbm [shape: f32[8,128], index: 8, kind: output, shape index: {}]
  %s9 = sld [smem:[#allocation0]]
  $region50: #{tpu_custom_call.1} parent=0
    _
  %s11 = ssub.s32 1, %s9
  %s12 = scalar_select 0, %s11, %s9
  %13 = sst [smem:[#allocation2]] %s0
  $region1: #{tpu_custom_call.1} parent=0
    #allocation3 [shape = 'u8[131072]{0}', space=vmem, size = 0x20000, scoped, tag = 'input window, operand 2, single buffered']
    #allocation4 [shape = 's32[1]{0}', space=sflag, size = 0x4, scoped, tag = 'scoped memory for tpu_custom_call.1']
    #allocation5 [shape = 's32[1]{0}', space=sflag, size = 0x4, scoped, tag = 'scoped memory for tpu_custom_call.1']
    #allocation6 [shape = 'u8[1048576]{0}', space=vmem, size = 0x100000, scoped, tag = 'input window, operand 5, single buffered']
    #allocation7 [shape = 's32[1]{0}', space=sflag, size = 0x4, scoped, tag = 'scoped memory for tpu_custom_call.1']
    #allocation8 [shape = 'u8[4096]{0}', space=vmem, size = 0x1000, scoped, tag = 'output window, operand 0, single buffered']
    %14 = vsyncpa [#allocation4], 0
    %15 = vsyncpa [#allocation7], 0
    %16 = vsyncpa [#allocation5], 0
    // Predicated region
    $region2: #{tpu_custom_call.1} parent=1 // pred_check
      _
    $region3: #{tpu_custom_call.1} parent=1 // pred_check_branch
      %18 = sbr.rel (0) target = $region5
    $region4: #{tpu_custom_call.1} parent=1 // pred_region
      _
    $region5: #{tpu_custom_call.1} parent=1 // pred_fallthru
      _
    // Predicated region
    $region6: #{tpu_custom_call.1} parent=1 // pred_check
      _
    $region7: #{tpu_custom_call.1} parent=1 // pred_check_branch
      %20 = sbr.rel (0) target = $region9
    $region8: #{tpu_custom_call.1} parent=1 // pred_region
      _
    $region9: #{tpu_custom_call.1} parent=1 // pred_fallthru
      _
    // Predicated region
    $region10: #{tpu_custom_call.1} parent=1 // pred_check
      _
    $region11: #{tpu_custom_call.1} parent=1 // pred_check_branch
      %22 = sbr.rel (0) target = $region13
    $region12: #{tpu_custom_call.1} parent=1 // pred_region
      %24 = vsyncadd [#allocation4], 0
      %s25 = sshll.u32 %s2, 4
      %s26 = int_to_ptr.hbm [resolvable:$true] %s25
      %s27 = sshll.u32 [#allocation3], 4
      %s28 = int_to_ptr.vmem [resolvable:$true] %s27
      %33 = dma.hbm_to_vmem [thread:$0]  %s26, 4096, %s28, [#allocation4], 256, 256, 16
    $region13: #{tpu_custom_call.1} parent=1 // pred_fallthru
      _
    // Predicated region
    $region14: #{tpu_custom_call.1} parent=1 // pred_check
      _
    $region15: #{tpu_custom_call.1} parent=1 // pred_check_branch
      %35 = sbr.rel (0) target = $region17
    $region16: #{tpu_custom_call.1} parent=1 // pred_region
      _
    $region17: #{tpu_custom_call.1} parent=1 // pred_fallthru
      _
    // Predicated region
    $region18: #{tpu_custom_call.1} parent=1 // pred_check
      _
    $region19: #{tpu_custom_call.1} parent=1 // pred_check_branch
      %37 = sbr.rel (0) target = $region21
    $region20: #{tpu_custom_call.1} parent=1 // pred_region
      _
    $region21: #{tpu_custom_call.1} parent=1 // pred_fallthru
      _
    // Predicated region
    $region22: #{tpu_custom_call.1} parent=1 // pred_check
      _
    $region23: #{tpu_custom_call.1} parent=1 // pred_check_branch
      %39 = sbr.rel (0) target = $region25
    $region24: #{tpu_custom_call.1} parent=1 // pred_region
      %41 = vsyncadd [#allocation7], 0
      %s42 = sshll.u32 %s5, 4
      %s43 = int_to_ptr.hbm [resolvable:$true] %s42
      %s44 = sshll.u32 [#allocation6], 4
      %s45 = int_to_ptr.vmem [resolvable:$true] %s44
      %50 = dma.hbm_to_vmem [thread:$0]  %s43, 32768, %s45, [#allocation7], 256, 256, 16
    $region25: #{tpu_custom_call.1} parent=1 // pred_fallthru
      _
    // Predicated region
    $region26: #{tpu_custom_call.1} parent=1 // pred_check
      _
    $region27: #{tpu_custom_call.1} parent=1 // pred_check_branch
      %52 = sbr.rel (0) target = $region29
    $region28: #{tpu_custom_call.1} parent=1 // pred_region
      _
    $region29: #{tpu_custom_call.1} parent=1 // pred_fallthru
      _
    // Predicated region
    $region30: #{tpu_custom_call.1} parent=1 // pred_check
      _
    $region31: #{tpu_custom_call.1} parent=1 // pred_check_branch
      %54 = sbr.rel (0) target = $region33
    $region32: #{tpu_custom_call.1} parent=1 // pred_region
      _
    $region33: #{tpu_custom_call.1} parent=1 // pred_fallthru
      _
    // Predicated region
    $region34: #{tpu_custom_call.1} parent=1 // pred_check
      _
    $region35: #{tpu_custom_call.1} parent=1 // pred_check_branch
      %56 = sbr.rel (0) target = $region37
    $region36: #{tpu_custom_call.1} parent=1 // pred_region
      %58 = dma.done [#allocation4], 4096
    $region37: #{tpu_custom_call.1} parent=1 // pred_fallthru
      _
    // Predicated region
    $region38: #{tpu_custom_call.1} parent=1 // pred_check
      _
    $region39: #{tpu_custom_call.1} parent=1 // pred_check_branch
      %60 = sbr.rel (0) target = $region41
    $region40: #{tpu_custom_call.1} parent=1 // pred_region
      %62 = dma.done [#allocation7], 32768
    $region41: #{tpu_custom_call.1} parent=1 // pred_fallthru
      _
    %v63 = vld [vmem:[%s1] sm:$0xff]
    %v64 = vld [vmem:[%s1 + $0x8] sm:$0xff]
    %v65 = vld [vmem:[%s1 + $0x10] sm:$0x3]
    %v66 = vld [vmem:[#allocation3] sm:$0xff]
    %v67 = vld [vmem:[#allocation3 + $0x8] sm:$0xff]
    %v68 = vld [vmem:[#allocation3 + $0x10] sm:$0xff]
    %v69 = vld [vmem:[#allocation3 + $0x18] sm:$0xff]
    %v70 = vld [vmem:[#allocation3 + $0x20] sm:$0xff]
    %v71 = vld [vmem:[#allocation3 + $0x28] sm:$0xff]
    %v72 = vld [vmem:[#allocation3 + $0x30] sm:$0xff]
    %v73 = vld [vmem:[#allocation3 + $0x38] sm:$0xff]
    %v74 = vld [vmem:[#allocation3 + $0x40] sm:$0xff]
    %v75 = vld [vmem:[#allocation3 + $0x48] sm:$0xff]
    %v76 = vld [vmem:[#allocation3 + $0x50] sm:$0xff]
    %v77 = vld [vmem:[#allocation3 + $0x58] sm:$0xff]
    %v78 = vld [vmem:[#allocation3 + $0x60] sm:$0xff]
    %v79 = vld [vmem:[#allocation3 + $0x68] sm:$0xff]
    %v80 = vld [vmem:[#allocation3 + $0x70] sm:$0xff]
    %v81 = vld [vmem:[#allocation3 + $0x78] sm:$0xff]
    %v82 = vld [vmem:[#allocation3 + $0x80] sm:$0xff]
    %v83 = vld [vmem:[#allocation3 + $0x88] sm:$0xff]
    %v84 = vld [vmem:[#allocation3 + $0x90] sm:$0xff]
    %v85 = vld [vmem:[#allocation3 + $0x98] sm:$0xff]
    %v86 = vld [vmem:[#allocation3 + $0xa0] sm:$0xff]
    %v87 = vld [vmem:[#allocation3 + $0xa8] sm:$0xff]
    %v88 = vld [vmem:[#allocation3 + $0xb0] sm:$0xff]
    %v89 = vld [vmem:[#allocation3 + $0xb8] sm:$0xff]
    %v90 = vld [vmem:[#allocation3 + $0xc0] sm:$0xff]
    %v91 = vld [vmem:[#allocation3 + $0xc8] sm:$0xff]
    %v92 = vld [vmem:[#allocation3 + $0xd0] sm:$0xff]
    %v93 = vld [vmem:[#allocation3 + $0xd8] sm:$0xff]
    %v94 = vld [vmem:[#allocation3 + $0xe0] sm:$0xff]
    %v95 = vld [vmem:[#allocation3 + $0xe8] sm:$0xff]
    %v96 = vld [vmem:[#allocation3 + $0xf0] sm:$0xff]
    %v97 = vld [vmem:[#allocation3 + $0xf8] sm:$0xff]
    %98 = vmatpush.msra.mxu0 %v96
    %99 = vmatpush.msra.mxu0 %v94
    %100 = vmatpush.msra.mxu0 %v92
    %101 = vmatpush.msra.mxu0 %v90
    %102 = vmatpush.msra.mxu0 %v88
    %103 = vmatpush.msra.mxu0 %v86
    %104 = vmatpush.msra.mxu0 %v84
    %105 = vmatpush.msra.mxu0 %v82
    %106 = vmatpush.msra.mxu0 %v80
    %107 = vmatpush.msra.mxu0 %v78
    %108 = vmatpush.msra.mxu0 %v76
    %109 = vmatpush.msra.mxu0 %v74
    %110 = vmatpush.msra.mxu0 %v72
    %111 = vmatpush.msra.mxu0 %v70
    %112 = vmatpush.msra.mxu0 %v68
    %113 = vmatpush.msra.mxu0 %v66
    %114 = vmatmul.f32.gmra.mxu0 %v63
    %v115 = vpop.f32.mrf.mxu0
    %v116 = vadd.f32 0.0, %v115
    %117 = vmatmul.f32.gmra.mxu0 %v64
    %v118 = vpop.f32.mrf.mxu0
    %v119 = vadd.f32 0.0, %v118
    %120 = vmatmul.f32.gmra.mxu0 %v65
    %v121 = vpop.f32.mrf.mxu0
    %v122 = vadd.f32 0.0, %v121
    %123 = vdwg.mxu0
    %124 = vmatpush.msra.mxu0 %v97
    %125 = vmatpush.msra.mxu0 %v95
    %126 = vmatpush.msra.mxu0 %v93
    %127 = vmatpush.msra.mxu0 %v91
    %128 = vmatpush.msra.mxu0 %v89
    %129 = vmatpush.msra.mxu0 %v87
    %130 = vmatpush.msra.mxu0 %v85
    %131 = vmatpush.msra.mxu0 %v83
    %132 = vmatpush.msra.mxu0 %v81
    %133 = vmatpush.msra.mxu0 %v79
    %134 = vmatpush.msra.mxu0 %v77
    %135 = vmatpush.msra.mxu0 %v75
    %136 = vmatpush.msra.mxu0 %v73
    %137 = vmatpush.msra.mxu0 %v71
    %138 = vmatpush.msra.mxu0 %v69
    %139 = vmatpush.msra.mxu0 %v67
    %140 = vmatmul.f32.gmra.mxu0 %v63
    %v141 = vpop.f32.mrf.mxu0
    %v142 = vadd.f32 0.0, %v141
    %143 = vmatmul.f32.gmra.mxu0 %v64
    %v144 = vpop.f32.mrf.mxu0
    %v145 = vadd.f32 0.0, %v144
    %146 = vmatmul.f32.gmra.mxu0 %v65
    %v147 = vpop.f32.mrf.mxu0
    %v148 = vadd.f32 0.0, %v147
    %149 = vdwg.mxu0
    %v150 = vmul.f32 %v116, %v116
    %v151 = vmul.f32 %v119, %v119
    %v152 = vmul.f32 %v122, %v122
    %v153 = vmul.f32 %v142, %v142
    %v154 = vmul.f32 %v145, %v145
    %v155 = vmul.f32 %v148, %v148
    %v156 = vadd.f32 %v150, %v153
    %v157 = vadd.f32 %v151, %v154
    %v158 = vadd.f32 %v152, %v155
    %v159 = vmax.f32 %v156, 1.1754944e-38
    %v160 = vmax.f32 %v157, 1.1754944e-38
    %v161 = vmax.f32 %v158, 1.1754944e-38
    %v162 = vrsqrt.pop %v159
    %v163 = vmul.f32 %v162, %v159
    %v164 = vmul.f32 %v163, %v162
    %v165 = vmul.f32 0.5, %v164
    %v166 = vsub.f32 1.5, %v165
    %v167 = vmul.f32 %v162, %v166
    %vm168 = vweird.f32 %v159
    %vm169 = vweird.f32 %v162
    %vm170 = vmor %vm168, %vm169
    %v171 = vsel %vm170, %v162, %v167
    %v172 = vrsqrt.pop %v160
    %v173 = vmul.f32 %v172, %v160
    %v174 = vmul.f32 %v173, %v172
    %v175 = vmul.f32 0.5, %v174
    %v176 = vsub.f32 1.5, %v175
    %v177 = vmul.f32 %v172, %v176
    %vm178 = vweird.f32 %v160
    %vm179 = vweird.f32 %v172
    %vm180 = vmor %vm178, %vm179
    %v181 = vsel %vm180, %v172, %v177
    %v182 = vrsqrt.pop %v161
    %v183 = vmul.f32 %v182, %v161
    %v184 = vmul.f32 %v183, %v182
    %v185 = vmul.f32 0.5, %v184
    %v186 = vsub.f32 1.5, %v185
    %v187 = vmul.f32 %v182, %v186
    %vm188 = vweird.f32 %v161
    %vm189 = vweird.f32 %v182
    %vm190 = vmor %vm188, %vm189
    %v191 = vsel %vm190, %v182, %v187
    %s192 = sld [smem:[#allocation2]]
    %v193 = vld [vmem:[%s3] sm:$0x1]
    %v194 = vstv %s192
    %v195 = vmul.f32 %v194, %v193
    %v197 = vperm.slane %v195, 0
    %v199 = vmul.f32 %v197, %v171
    %v200 = vmul.f32 %v197, %v181
    %v201 = vmul.f32 %v197, %v191
    %v202 = vsub.f32 1.0, %v199
    %v203 = vsub.f32 1.0, %v200
    %v204 = vsub.f32 1.0, %v201
    %v205 = vmax.f32 %v202, 0.0
    %v206 = vmax.f32 %v203, 0.0
    %v207 = vmax.f32 %v204, 0.0
    %v208 = vmul.f32 %v116, %v205
    %v209 = vmul.f32 %v119, %v206
    %v210 = vmul.f32 %v122, %v207
    %v211 = vmul.f32 %v142, %v205
    %v212 = vmul.f32 %v145, %v206
    %v213 = vmul.f32 %v148, %v207
    %v214 = vld [vmem:[%s4] sm:$0xff]
    %v215 = vld [vmem:[%s4 + $0x8] sm:$0xff]
    %v216 = vld [vmem:[%s4 + $0x10] sm:$0xff]
    %v217 = vld [vmem:[%s4 + $0x18] sm:$0xff]
    %vm218 = vcmask 146432
    %v220 = vsel %vm218, %v214, 0
    %v223 = vsel %vm218, %v215, 0
    %v226 = vsel %vm218, %v216, 0
    %v229 = vsel %vm218, %v217, 0
    %vm231 = vcmask 1041408
    %v233 = vsel %vm231, %v210, 0
    %v236 = vsel %vm231, %v213, 0
    %238 = vmatpush.msra.mxu0 0.0
    %239 = vmatpush.msra.mxu0 0.0
    %240 = vmatpush.msra.mxu0 0.0
    %241 = vmatpush.msra.mxu0 0.0
    %242 = vmatpush.msra.mxu0 0.0
    %243 = vmatpush.msra.mxu0 0.0
    %244 = vmatpush.msra.mxu0 0.0
    %245 = vmatpush.msra.mxu0 0.0
    %246 = vmatpush.msra.mxu0 0.0
    %247 = vmatpush.msra.mxu0 0.0
    %248 = vmatpush.msra.mxu0 0.0
    %249 = vmatpush.msra.mxu0 0.0
    %250 = vmatpush.msra.mxu0 0.0
    %251 = vmatpush.msra.mxu0 %v233
    %252 = vmatpush.msra.mxu0 %v209
    %253 = vmatpush.msra.mxu0 %v208
    %254 = vmatmul.f32.gmra.mxu0 %v220
    %v255 = vpop.f32.mrf.mxu0
    %v256 = vadd.f32 0.0, %v255
    %257 = vmatmul.f32.gmra.mxu0 %v223
    %v258 = vpop.f32.mrf.mxu0
    %v259 = vadd.f32 0.0, %v258
    %260 = vmatmul.f32.gmra.mxu0 %v226
    %v261 = vpop.f32.mrf.mxu0
    %v262 = vadd.f32 0.0, %v261
    %263 = vmatmul.f32.gmra.mxu0 %v229
    %v264 = vpop.f32.mrf.mxu0
    %v265 = vadd.f32 0.0, %v264
    %266 = vdwg.mxu0
    %267 = vmatpush.msra.mxu0 0.0
    %268 = vmatpush.msra.mxu0 0.0
    %269 = vmatpush.msra.mxu0 0.0
    %270 = vmatpush.msra.mxu0 0.0
    %271 = vmatpush.msra.mxu0 0.0
    %272 = vmatpush.msra.mxu0 0.0
    %273 = vmatpush.msra.mxu0 0.0
    %274 = vmatpush.msra.mxu0 0.0
    %275 = vmatpush.msra.mxu0 0.0
    %276 = vmatpush.msra.mxu0 0.0
    %277 = vmatpush.msra.mxu0 0.0
    %278 = vmatpush.msra.mxu0 0.0
    %279 = vmatpush.msra.mxu0 0.0
    %280 = vmatpush.msra.mxu0 %v236
    %281 = vmatpush.msra.mxu0 %v212
    %282 = vmatpush.msra.mxu0 %v211
    %283 = vmatmul.f32.gmra.mxu0 %v220
    %v284 = vpop.f32.mrf.mxu0
    %v285 = vadd.f32 0.0, %v284
    %286 = vmatmul.f32.gmra.mxu0 %v223
    %v287 = vpop.f32.mrf.mxu0
    %v288 = vadd.f32 0.0, %v287
    %289 = vmatmul.f32.gmra.mxu0 %v226
    %v290 = vpop.f32.mrf.mxu0
    %v291 = vadd.f32 0.0, %v290
    %292 = vmatmul.f32.gmra.mxu0 %v229
    %v293 = vpop.f32.mrf.mxu0
    %v294 = vadd.f32 0.0, %v293
    %295 = vdwg.mxu0
    %v296 = vld [vmem:[#allocation6] sm:$0xff]
    %v297 = vld [vmem:[#allocation6 + $0x8] sm:$0xff]
    %v298 = vld [vmem:[#allocation6 + $0x10] sm:$0xff]
    %v299 = vld [vmem:[#allocation6 + $0x18] sm:$0xff]
    %v300 = vld [vmem:[#allocation6 + $0x20] sm:$0xff]
    %v301 = vld [vmem:[#allocation6 + $0x28] sm:$0xff]
    %v302 = vld [vmem:[#allocation6 + $0x30] sm:$0xff]
    %v303 = vld [vmem:[#allocation6 + $0x38] sm:$0xff]
    %v304 = vld [vmem:[#allocation6 + $0x40] sm:$0xff]
    %v305 = vld [vmem:[#allocation6 + $0x48] sm:$0xff]
    %v306 = vld [vmem:[#allocation6 + $0x50] sm:$0xff]
    %v307 = vld [vmem:[#allocation6 + $0x58] sm:$0xff]
    %v308 = vld [vmem:[#allocation6 + $0x60] sm:$0xff]
    %v309 = vld [vmem:[#allocation6 + $0x68] sm:$0xff]
    %v310 = vld [vmem:[#allocation6 + $0x70] sm:$0xff]
    %v311 = vld [vmem:[#allocation6 + $0x78] sm:$0xff]
    %v312 = vld [vmem:[#allocation6 + $0x80] sm:$0xff]
    %v313 = vld [vmem:[#allocation6 + $0x88] sm:$0xff]
    %v314 = vld [vmem:[#allocation6 + $0x90] sm:$0xff]
    %v315 = vld [vmem:[#allocation6 + $0x98] sm:$0xff]
    %v316 = vld [vmem:[#allocation6 + $0xa0] sm:$0xff]
    %v317 = vld [vmem:[#allocation6 + $0xa8] sm:$0xff]
    %v318 = vld [vmem:[#allocation6 + $0xb0] sm:$0xff]
    %v319 = vld [vmem:[#allocation6 + $0xb8] sm:$0xff]
    %v320 = vld [vmem:[#allocation6 + $0xc0] sm:$0xff]
    %v321 = vld [vmem:[#allocation6 + $0xc8] sm:$0xff]
    %v322 = vld [vmem:[#allocation6 + $0xd0] sm:$0xff]
    %v323 = vld [vmem:[#allocation6 + $0xd8] sm:$0xff]
    %v324 = vld [vmem:[#allocation6 + $0xe0] sm:$0xff]
    %v325 = vld [vmem:[#allocation6 + $0xe8] sm:$0xff]
    %v326 = vld [vmem:[#allocation6 + $0xf0] sm:$0xff]
    %v327 = vld [vmem:[#allocation6 + $0xf8] sm:$0xff]
    %v328 = vld [vmem:[#allocation6 + $0x100] sm:$0xff]
    %v329 = vld [vmem:[#allocation6 + $0x108] sm:$0xff]
    %v330 = vld [vmem:[#allocation6 + $0x110] sm:$0xff]
    %v331 = vld [vmem:[#allocation6 + $0x118] sm:$0xff]
    %v332 = vld [vmem:[#allocation6 + $0x120] sm:$0xff]
    %v333 = vld [vmem:[#allocation6 + $0x128] sm:$0xff]
    %v334 = vld [vmem:[#allocation6 + $0x130] sm:$0xff]
    %v335 = vld [vmem:[#allocation6 + $0x138] sm:$0xff]
    %v336 = vld [vmem:[#allocation6 + $0x140] sm:$0xff]
    %v337 = vld [vmem:[#allocation6 + $0x148] sm:$0xff]
    %v338 = vld [vmem:[#allocation6 + $0x150] sm:$0xff]
    %v339 = vld [vmem:[#allocation6 + $0x158] sm:$0xff]
    %v340 = vld [vmem:[#allocation6 + $0x160] sm:$0xff]
    %v341 = vld [vmem:[#allocation6 + $0x168] sm:$0xff]
    %v342 = vld [vmem:[#allocation6 + $0x170] sm:$0xff]
    %v343 = vld [vmem:[#allocation6 + $0x178] sm:$0xff]
    %v344 = vld [vmem:[#allocation6 + $0x180] sm:$0xff]
    %v345 = vld [vmem:[#allocation6 + $0x188] sm:$0xff]
    %v346 = vld [vmem:[#allocation6 + $0x190] sm:$0xff]
    %v347 = vld [vmem:[#allocation6 + $0x198] sm:$0xff]
    %v348 = vld [vmem:[#allocation6 + $0x1a0] sm:$0xff]
    %v349 = vld [vmem:[#allocation6 + $0x1a8] sm:$0xff]
    %v350 = vld [vmem:[#allocation6 + $0x1b0] sm:$0xff]
    %v351 = vld [vmem:[#allocation6 + $0x1b8] sm:$0xff]
    %v352 = vld [vmem:[#allocation6 + $0x1c0] sm:$0xff]
    %v353 = vld [vmem:[#allocation6 + $0x1c8] sm:$0xff]
    %v354 = vld [vmem:[#allocation6 + $0x1d0] sm:$0xff]
    %v355 = vld [vmem:[#allocation6 + $0x1d8] sm:$0xff]
    %v356 = vld [vmem:[#allocation6 + $0x1e0] sm:$0xff]
    %v357 = vld [vmem:[#allocation6 + $0x1e8] sm:$0xff]
    %v358 = vld [vmem:[#allocation6 + $0x1f0] sm:$0xff]
    %v359 = vld [vmem:[#allocation6 + $0x1f8] sm:$0xff]
    %360 = vmatpush.msra.mxu0 %v326
    %361 = vmatpush.msra.mxu0 %v324
    %362 = vmatpush.msra.mxu0 %v322
    %363 = vmatpush.msra.mxu0 %v320
    %364 = vmatpush.msra.mxu0 %v318
    %365 = vmatpush.msra.mxu0 %v316
    %366 = vmatpush.msra.mxu0 %v314
    %367 = vmatpush.msra.mxu0 %v312
    %368 = vmatpush.msra.mxu0 %v310
    %369 = vmatpush.msra.mxu0 %v308
    %370 = vmatpush.msra.mxu0 %v306
    %371 = vmatpush.msra.mxu0 %v304
    %372 = vmatpush.msra.mxu0 %v302
    %373 = vmatpush.msra.mxu0 %v300
    %374 = vmatpush.msra.mxu0 %v298
    %375 = vmatpush.msra.mxu0 %v296
    %376 = vmatmul.f32.gmra.mxu0 %v256
    %v377 = vpop.f32.mrf.mxu0
    %v378 = vadd.f32 0.0, %v377
    %379 = vdwg.mxu0
    %380 = vmatpush.msra.mxu0 %v358
    %381 = vmatpush.msra.mxu0 %v356
    %382 = vmatpush.msra.mxu0 %v354
    %383 = vmatpush.msra.mxu0 %v352
    %384 = vmatpush.msra.mxu0 %v350
    %385 = vmatpush.msra.mxu0 %v348
    %386 = vmatpush.msra.mxu0 %v346
    %387 = vmatpush.msra.mxu0 %v344
    %388 = vmatpush.msra.mxu0 %v342
    %389 = vmatpush.msra.mxu0 %v340
    %390 = vmatpush.msra.mxu0 %v338
    %391 = vmatpush.msra.mxu0 %v336
    %392 = vmatpush.msra.mxu0 %v334
    %393 = vmatpush.msra.mxu0 %v332
    %394 = vmatpush.msra.mxu0 %v330
    %395 = vmatpush.msra.mxu0 %v328
    %396 = vmatmul.f32.gmra.mxu0 %v285
    %v397 = vpop.f32.mrf.mxu0
    %v398 = vadd.f32 %v378, %v397
    %399 = vdwg.mxu0
    %400 = vmatpush.msra.mxu0 %v327
    %401 = vmatpush.msra.mxu0 %v325
    %402 = vmatpush.msra.mxu0 %v323
    %403 = vmatpush.msra.mxu0 %v321
    %404 = vmatpush.msra.mxu0 %v319
    %405 = vmatpush.msra.mxu0 %v317
    %406 = vmatpush.msra.mxu0 %v315
    %407 = vmatpush.msra.mxu0 %v313
    %408 = vmatpush.msra.mxu0 %v311
    %409 = vmatpush.msra.mxu0 %v309
    %410 = vmatpush.msra.mxu0 %v307
    %411 = vmatpush.msra.mxu0 %v305
    %412 = vmatpush.msra.mxu0 %v303
    %413 = vmatpush.msra.mxu0 %v301
    %414 = vmatpush.msra.mxu0 %v299
    %415 = vmatpush.msra.mxu0 %v297
    %416 = vmatmul.f32.gmra.mxu0 %v256
    %v417 = vpop.f32.mrf.mxu0
    %v418 = vadd.f32 0.0, %v417
    %419 = vdwg.mxu0
    %420 = vmatpush.msra.mxu0 %v359
    %421 = vmatpush.msra.mxu0 %v357
    %422 = vmatpush.msra.mxu0 %v355
    %423 = vmatpush.msra.mxu0 %v353
    %424 = vmatpush.msra.mxu0 %v351
    %425 = vmatpush.msra.mxu0 %v349
    %426 = vmatpush.msra.mxu0 %v347
    %427 = vmatpush.msra.mxu0 %v345
    %428 = vmatpush.msra.mxu0 %v343
    %429 = vmatpush.msra.mxu0 %v341
    %430 = vmatpush.msra.mxu0 %v339
    %431 = vmatpush.msra.mxu0 %v337
    %432 = vmatpush.msra.mxu0 %v335
    %433 = vmatpush.msra.mxu0 %v333
    %434 = vmatpush.msra.mxu0 %v331
    %435 = vmatpush.msra.mxu0 %v329
    %436 = vmatmul.f32.gmra.mxu0 %v285
    %v437 = vpop.f32.mrf.mxu0
    %v438 = vadd.f32 %v418, %v437
    %439 = vdwg.mxu0
    %v440 = vadd.f32 %v398, 0.0
    %v441 = vadd.f32 %v438, 0.0
    %s442 = scalar_lea.vmem [#allocation6], 512
    %v443 = vld [vmem:[%s442] sm:$0xff]
    %v444 = vld [vmem:[%s442 + $0x8] sm:$0xff]
    %v445 = vld [vmem:[%s442 + $0x10] sm:$0xff]
    %v446 = vld [vmem:[%s442 + $0x18] sm:$0xff]
    %v447 = vld [vmem:[%s442 + $0x20] sm:$0xff]
    %v448 = vld [vmem:[%s442 + $0x28] sm:$0xff]
    %v449 = vld [vmem:[%s442 + $0x30] sm:$0xff]
    %v450 = vld [vmem:[%s442 + $0x38] sm:$0xff]
    %v451 = vld [vmem:[%s442 + $0x40] sm:$0xff]
    %v452 = vld [vmem:[%s442 + $0x48] sm:$0xff]
    %v453 = vld [vmem:[%s442 + $0x50] sm:$0xff]
    %v454 = vld [vmem:[%s442 + $0x58] sm:$0xff]
    %v455 = vld [vmem:[%s442 + $0x60] sm:$0xff]
    %v456 = vld [vmem:[%s442 + $0x68] sm:$0xff]
    %v457 = vld [vmem:[%s442 + $0x70] sm:$0xff]
    %v458 = vld [vmem:[%s442 + $0x78] sm:$0xff]
    %v459 = vld [vmem:[%s442 + $0x80] sm:$0xff]
    %v460 = vld [vmem:[%s442 + $0x88] sm:$0xff]
    %v461 = vld [vmem:[%s442 + $0x90] sm:$0xff]
    %v462 = vld [vmem:[%s442 + $0x98] sm:$0xff]
    %v463 = vld [vmem:[%s442 + $0xa0] sm:$0xff]
    %v464 = vld [vmem:[%s442 + $0xa8] sm:$0xff]
    %v465 = vld [vmem:[%s442 + $0xb0] sm:$0xff]
    %v466 = vld [vmem:[%s442 + $0xb8] sm:$0xff]
    %v467 = vld [vmem:[%s442 + $0xc0] sm:$0xff]
    %v468 = vld [vmem:[%s442 + $0xc8] sm:$0xff]
    %v469 = vld [vmem:[%s442 + $0xd0] sm:$0xff]
    %v470 = vld [vmem:[%s442 + $0xd8] sm:$0xff]
    %v471 = vld [vmem:[%s442 + $0xe0] sm:$0xff]
    %v472 = vld [vmem:[%s442 + $0xe8] sm:$0xff]
    %v473 = vld [vmem:[%s442 + $0xf0] sm:$0xff]
    %v474 = vld [vmem:[%s442 + $0xf8] sm:$0xff]
    %v475 = vld [vmem:[%s442 + $0x100] sm:$0xff]
    %v476 = vld [vmem:[%s442 + $0x108] sm:$0xff]
    %v477 = vld [vmem:[%s442 + $0x110] sm:$0xff]
    %v478 = vld [vmem:[%s442 + $0x118] sm:$0xff]
    %v479 = vld [vmem:[%s442 + $0x120] sm:$0xff]
    %v480 = vld [vmem:[%s442 + $0x128] sm:$0xff]
    %v481 = vld [vmem:[%s442 + $0x130] sm:$0xff]
    %v482 = vld [vmem:[%s442 + $0x138] sm:$0xff]
    %v483 = vld [vmem:[%s442 + $0x140] sm:$0xff]
    %v484 = vld [vmem:[%s442 + $0x148] sm:$0xff]
    %v485 = vld [vmem:[%s442 + $0x150] sm:$0xff]
    %v486 = vld [vmem:[%s442 + $0x158] sm:$0xff]
    %v487 = vld [vmem:[%s442 + $0x160] sm:$0xff]
    %v488 = vld [vmem:[%s442 + $0x168] sm:$0xff]
    %v489 = vld [vmem:[%s442 + $0x170] sm:$0xff]
    %v490 = vld [vmem:[%s442 + $0x178] sm:$0xff]
    %v491 = vld [vmem:[%s442 + $0x180] sm:$0xff]
    %v492 = vld [vmem:[%s442 + $0x188] sm:$0xff]
    %v493 = vld [vmem:[%s442 + $0x190] sm:$0xff]
    %v494 = vld [vmem:[%s442 + $0x198] sm:$0xff]
    %v495 = vld [vmem:[%s442 + $0x1a0] sm:$0xff]
    %v496 = vld [vmem:[%s442 + $0x1a8] sm:$0xff]
    %v497 = vld [vmem:[%s442 + $0x1b0] sm:$0xff]
    %v498 = vld [vmem:[%s442 + $0x1b8] sm:$0xff]
    %v499 = vld [vmem:[%s442 + $0x1c0] sm:$0xff]
    %v500 = vld [vmem:[%s442 + $0x1c8] sm:$0xff]
    %v501 = vld [vmem:[%s442 + $0x1d0] sm:$0xff]
    %v502 = vld [vmem:[%s442 + $0x1d8] sm:$0xff]
    %v503 = vld [vmem:[%s442 + $0x1e0] sm:$0xff]
    %v504 = vld [vmem:[%s442 + $0x1e8] sm:$0xff]
    %v505 = vld [vmem:[%s442 + $0x1f0] sm:$0xff]
    %v506 = vld [vmem:[%s442 + $0x1f8] sm:$0xff]
    %507 = vmatpush.msra.mxu0 %v473
    %508 = vmatpush.msra.mxu0 %v471
    %509 = vmatpush.msra.mxu0 %v469
    %510 = vmatpush.msra.mxu0 %v467
    %511 = vmatpush.msra.mxu0 %v465
    %512 = vmatpush.msra.mxu0 %v463
    %513 = vmatpush.msra.mxu0 %v461
    %514 = vmatpush.msra.mxu0 %v459
    %515 = vmatpush.msra.mxu0 %v457
    %516 = vmatpush.msra.mxu0 %v455
    %517 = vmatpush.msra.mxu0 %v453
    %518 = vmatpush.msra.mxu0 %v451
    %519 = vmatpush.msra.mxu0 %v449
    %520 = vmatpush.msra.mxu0 %v447
    %521 = vmatpush.msra.mxu0 %v445
    %522 = vmatpush.msra.mxu0 %v443
    %523 = vmatmul.f32.gmra.mxu0 %v259
    %v524 = vpop.f32.mrf.mxu0
    %v525 = vadd.f32 0.0, %v524
    %526 = vdwg.mxu0
    %527 = vmatpush.msra.mxu0 %v505
    %528 = vmatpush.msra.mxu0 %v503
    %529 = vmatpush.msra.mxu0 %v501
    %530 = vmatpush.msra.mxu0 %v499
    %531 = vmatpush.msra.mxu0 %v497
    %532 = vmatpush.msra.mxu0 %v495
    %533 = vmatpush.msra.mxu0 %v493
    %534 = vmatpush.msra.mxu0 %v491
    %535 = vmatpush.msra.mxu0 %v489
    %536 = vmatpush.msra.mxu0 %v487
    %537 = vmatpush.msra.mxu0 %v485
    %538 = vmatpush.msra.mxu0 %v483
    %539 = vmatpush.msra.mxu0 %v481
    %540 = vmatpush.msra.mxu0 %v479
    %541 = vmatpush.msra.mxu0 %v477
    %542 = vmatpush.msra.mxu0 %v475
    %543 = vmatmul.f32.gmra.mxu0 %v288
    %v544 = vpop.f32.mrf.mxu0
    %v545 = vadd.f32 %v525, %v544
    %546 = vdwg.mxu0
    %547 = vmatpush.msra.mxu0 %v474
    %548 = vmatpush.msra.mxu0 %v472
    %549 = vmatpush.msra.mxu0 %v470
    %550 = vmatpush.msra.mxu0 %v468
    %551 = vmatpush.msra.mxu0 %v466
    %552 = vmatpush.msra.mxu0 %v464
    %553 = vmatpush.msra.mxu0 %v462
    %554 = vmatpush.msra.mxu0 %v460
    %555 = vmatpush.msra.mxu0 %v458
    %556 = vmatpush.msra.mxu0 %v456
    %557 = vmatpush.msra.mxu0 %v454
    %558 = vmatpush.msra.mxu0 %v452
    %559 = vmatpush.msra.mxu0 %v450
    %560 = vmatpush.msra.mxu0 %v448
    %561 = vmatpush.msra.mxu0 %v446
    %562 = vmatpush.msra.mxu0 %v444
    %563 = vmatmul.f32.gmra.mxu0 %v259
    %v564 = vpop.f32.mrf.mxu0
    %v565 = vadd.f32 0.0, %v564
    %566 = vdwg.mxu0
    %567 = vmatpush.msra.mxu0 %v506
    %568 = vmatpush.msra.mxu0 %v504
    %569 = vmatpush.msra.mxu0 %v502
    %570 = vmatpush.msra.mxu0 %v500
    %571 = vmatpush.msra.mxu0 %v498
    %572 = vmatpush.msra.mxu0 %v496
    %573 = vmatpush.msra.mxu0 %v494
    %574 = vmatpush.msra.mxu0 %v492
    %575 = vmatpush.msra.mxu0 %v490
    %576 = vmatpush.msra.mxu0 %v488
    %577 = vmatpush.msra.mxu0 %v486
    %578 = vmatpush.msra.mxu0 %v484
    %579 = vmatpush.msra.mxu0 %v482
    %580 = vmatpush.msra.mxu0 %v480
    %581 = vmatpush.msra.mxu0 %v478
    %582 = vmatpush.msra.mxu0 %v476
    %583 = vmatmul.f32.gmra.mxu0 %v288
    %v584 = vpop.f32.mrf.mxu0
    %v585 = vadd.f32 %v565, %v584
    %586 = vdwg.mxu0
    %v587 = vadd.f32 %v440, %v545
    %v588 = vadd.f32 %v441, %v585
    %s589 = scalar_lea.vmem [#allocation6], 1024
    %v590 = vld [vmem:[%s589] sm:$0xff]
    %v591 = vld [vmem:[%s589 + $0x8] sm:$0xff]
    %v592 = vld [vmem:[%s589 + $0x10] sm:$0xff]
    %v593 = vld [vmem:[%s589 + $0x18] sm:$0xff]
    %v594 = vld [vmem:[%s589 + $0x20] sm:$0xff]
    %v595 = vld [vmem:[%s589 + $0x28] sm:$0xff]
    %v596 = vld [vmem:[%s589 + $0x30] sm:$0xff]
    %v597 = vld [vmem:[%s589 + $0x38] sm:$0xff]
    %v598 = vld [vmem:[%s589 + $0x40] sm:$0xff]
    %v599 = vld [vmem:[%s589 + $0x48] sm:$0xff]
    %v600 = vld [vmem:[%s589 + $0x50] sm:$0xff]
    %v601 = vld [vmem:[%s589 + $0x58] sm:$0xff]
    %v602 = vld [vmem:[%s589 + $0x60] sm:$0xff]
    %v603 = vld [vmem:[%s589 + $0x68] sm:$0xff]
    %v604 = vld [vmem:[%s589 + $0x70] sm:$0xff]
    %v605 = vld [vmem:[%s589 + $0x78] sm:$0xff]
    %v606 = vld [vmem:[%s589 + $0x80] sm:$0xff]
    %v607 = vld [vmem:[%s589 + $0x88] sm:$0xff]
    %v608 = vld [vmem:[%s589 + $0x90] sm:$0xff]
    %v609 = vld [vmem:[%s589 + $0x98] sm:$0xff]
    %v610 = vld [vmem:[%s589 + $0xa0] sm:$0xff]
    %v611 = vld [vmem:[%s589 + $0xa8] sm:$0xff]
    %v612 = vld [vmem:[%s589 + $0xb0] sm:$0xff]
    %v613 = vld [vmem:[%s589 + $0xb8] sm:$0xff]
    %v614 = vld [vmem:[%s589 + $0xc0] sm:$0xff]
    %v615 = vld [vmem:[%s589 + $0xc8] sm:$0xff]
    %v616 = vld [vmem:[%s589 + $0xd0] sm:$0xff]
    %v617 = vld [vmem:[%s589 + $0xd8] sm:$0xff]
    %v618 = vld [vmem:[%s589 + $0xe0] sm:$0xff]
    %v619 = vld [vmem:[%s589 + $0xe8] sm:$0xff]
    %v620 = vld [vmem:[%s589 + $0xf0] sm:$0xff]
    %v621 = vld [vmem:[%s589 + $0xf8] sm:$0xff]
    %v622 = vld [vmem:[%s589 + $0x100] sm:$0xff]
    %v623 = vld [vmem:[%s589 + $0x108] sm:$0xff]
    %v624 = vld [vmem:[%s589 + $0x110] sm:$0xff]
    %v625 = vld [vmem:[%s589 + $0x118] sm:$0xff]
    %v626 = vld [vmem:[%s589 + $0x120] sm:$0xff]
    %v627 = vld [vmem:[%s589 + $0x128] sm:$0xff]
    %v628 = vld [vmem:[%s589 + $0x130] sm:$0xff]
    %v629 = vld [vmem:[%s589 + $0x138] sm:$0xff]
    %v630 = vld [vmem:[%s589 + $0x140] sm:$0xff]
    %v631 = vld [vmem:[%s589 + $0x148] sm:$0xff]
    %v632 = vld [vmem:[%s589 + $0x150] sm:$0xff]
    %v633 = vld [vmem:[%s589 + $0x158] sm:$0xff]
    %v634 = vld [vmem:[%s589 + $0x160] sm:$0xff]
    %v635 = vld [vmem:[%s589 + $0x168] sm:$0xff]
    %v636 = vld [vmem:[%s589 + $0x170] sm:$0xff]
    %v637 = vld [vmem:[%s589 + $0x178] sm:$0xff]
    %v638 = vld [vmem:[%s589 + $0x180] sm:$0xff]
    %v639 = vld [vmem:[%s589 + $0x188] sm:$0xff]
    %v640 = vld [vmem:[%s589 + $0x190] sm:$0xff]
    %v641 = vld [vmem:[%s589 + $0x198] sm:$0xff]
    %v642 = vld [vmem:[%s589 + $0x1a0] sm:$0xff]
    %v643 = vld [vmem:[%s589 + $0x1a8] sm:$0xff]
    %v644 = vld [vmem:[%s589 + $0x1b0] sm:$0xff]
    %v645 = vld [vmem:[%s589 + $0x1b8] sm:$0xff]
    %v646 = vld [vmem:[%s589 + $0x1c0] sm:$0xff]
    %v647 = vld [vmem:[%s589 + $0x1c8] sm:$0xff]
    %v648 = vld [vmem:[%s589 + $0x1d0] sm:$0xff]
    %v649 = vld [vmem:[%s589 + $0x1d8] sm:$0xff]
    %v650 = vld [vmem:[%s589 + $0x1e0] sm:$0xff]
    %v651 = vld [vmem:[%s589 + $0x1e8] sm:$0xff]
    %v652 = vld [vmem:[%s589 + $0x1f0] sm:$0xff]
    %v653 = vld [vmem:[%s589 + $0x1f8] sm:$0xff]
    %654 = vmatpush.msra.mxu0 %v620
    %655 = vmatpush.msra.mxu0 %v618
    %656 = vmatpush.msra.mxu0 %v616
    %657 = vmatpush.msra.mxu0 %v614
    %658 = vmatpush.msra.mxu0 %v612
    %659 = vmatpush.msra.mxu0 %v610
    %660 = vmatpush.msra.mxu0 %v608
    %661 = vmatpush.msra.mxu0 %v606
    %662 = vmatpush.msra.mxu0 %v604
    %663 = vmatpush.msra.mxu0 %v602
    %664 = vmatpush.msra.mxu0 %v600
    %665 = vmatpush.msra.mxu0 %v598
    %666 = vmatpush.msra.mxu0 %v596
    %667 = vmatpush.msra.mxu0 %v594
    %668 = vmatpush.msra.mxu0 %v592
    %669 = vmatpush.msra.mxu0 %v590
    %670 = vmatmul.f32.gmra.mxu0 %v262
    %v671 = vpop.f32.mrf.mxu0
    %v672 = vadd.f32 0.0, %v671
    %673 = vdwg.mxu0
    %674 = vmatpush.msra.mxu0 %v652
    %675 = vmatpush.msra.mxu0 %v650
    %676 = vmatpush.msra.mxu0 %v648
    %677 = vmatpush.msra.mxu0 %v646
    %678 = vmatpush.msra.mxu0 %v644
    %679 = vmatpush.msra.mxu0 %v642
    %680 = vmatpush.msra.mxu0 %v640
    %681 = vmatpush.msra.mxu0 %v638
    %682 = vmatpush.msra.mxu0 %v636
    %683 = vmatpush.msra.mxu0 %v634
    %684 = vmatpush.msra.mxu0 %v632
    %685 = vmatpush.msra.mxu0 %v630
    %686 = vmatpush.msra.mxu0 %v628
    %687 = vmatpush.msra.mxu0 %v626
    %688 = vmatpush.msra.mxu0 %v624
    %689 = vmatpush.msra.mxu0 %v622
    %690 = vmatmul.f32.gmra.mxu0 %v291
    %v691 = vpop.f32.mrf.mxu0
    %v692 = vadd.f32 %v672, %v691
    %693 = vdwg.mxu0
    %694 = vmatpush.msra.mxu0 %v621
    %695 = vmatpush.msra.mxu0 %v619
    %696 = vmatpush.msra.mxu0 %v617
    %697 = vmatpush.msra.mxu0 %v615
    %698 = vmatpush.msra.mxu0 %v613
    %699 = vmatpush.msra.mxu0 %v611
    %700 = vmatpush.msra.mxu0 %v609
    %701 = vmatpush.msra.mxu0 %v607
    %702 = vmatpush.msra.mxu0 %v605
    %703 = vmatpush.msra.mxu0 %v603
    %704 = vmatpush.msra.mxu0 %v601
    %705 = vmatpush.msra.mxu0 %v599
    %706 = vmatpush.msra.mxu0 %v597
    %707 = vmatpush.msra.mxu0 %v595
    %708 = vmatpush.msra.mxu0 %v593
    %709 = vmatpush.msra.mxu0 %v591
    %710 = vmatmul.f32.gmra.mxu0 %v262
    %v711 = vpop.f32.mrf.mxu0
    %v712 = vadd.f32 0.0, %v711
    %713 = vdwg.mxu0
    %714 = vmatpush.msra.mxu0 %v653
    %715 = vmatpush.msra.mxu0 %v651
    %716 = vmatpush.msra.mxu0 %v649
    %717 = vmatpush.msra.mxu0 %v647
    %718 = vmatpush.msra.mxu0 %v645
    %719 = vmatpush.msra.mxu0 %v643
    %720 = vmatpush.msra.mxu0 %v641
    %721 = vmatpush.msra.mxu0 %v639
    %722 = vmatpush.msra.mxu0 %v637
    %723 = vmatpush.msra.mxu0 %v635
    %724 = vmatpush.msra.mxu0 %v633
    %725 = vmatpush.msra.mxu0 %v631
    %726 = vmatpush.msra.mxu0 %v629
    %727 = vmatpush.msra.mxu0 %v627
    %728 = vmatpush.msra.mxu0 %v625
    %729 = vmatpush.msra.mxu0 %v623
    %730 = vmatmul.f32.gmra.mxu0 %v291
    %v731 = vpop.f32.mrf.mxu0
    %v732 = vadd.f32 %v712, %v731
    %733 = vdwg.mxu0
    %v734 = vadd.f32 %v587, %v692
    %v735 = vadd.f32 %v588, %v732
    %s736 = scalar_lea.vmem [#allocation6], 1536
    %v737 = vld [vmem:[%s736] sm:$0xff]
    %v738 = vld [vmem:[%s736 + $0x8] sm:$0xff]
    %v739 = vld [vmem:[%s736 + $0x10] sm:$0xff]
    %v740 = vld [vmem:[%s736 + $0x18] sm:$0xff]
    %v741 = vld [vmem:[%s736 + $0x20] sm:$0xff]
    %v742 = vld [vmem:[%s736 + $0x28] sm:$0xff]
    %v743 = vld [vmem:[%s736 + $0x30] sm:$0xff]
    %v744 = vld [vmem:[%s736 + $0x38] sm:$0xff]
    %v745 = vld [vmem:[%s736 + $0x40] sm:$0xff]
    %v746 = vld [vmem:[%s736 + $0x48] sm:$0xff]
    %v747 = vld [vmem:[%s736 + $0x50] sm:$0xff]
    %v748 = vld [vmem:[%s736 + $0x58] sm:$0xff]
    %v749 = vld [vmem:[%s736 + $0x60] sm:$0xff]
    %v750 = vld [vmem:[%s736 + $0x68] sm:$0xff]
    %v751 = vld [vmem:[%s736 + $0x70] sm:$0xff]
    %v752 = vld [vmem:[%s736 + $0x78] sm:$0xff]
    %v753 = vld [vmem:[%s736 + $0x80] sm:$0xff]
    %v754 = vld [vmem:[%s736 + $0x88] sm:$0xff]
    %v755 = vld [vmem:[%s736 + $0x90] sm:$0xff]
    %v756 = vld [vmem:[%s736 + $0x98] sm:$0xff]
    %v757 = vld [vmem:[%s736 + $0xa0] sm:$0xff]
    %v758 = vld [vmem:[%s736 + $0xa8] sm:$0xff]
    %v759 = vld [vmem:[%s736 + $0xb0] sm:$0xff]
    %v760 = vld [vmem:[%s736 + $0xb8] sm:$0xff]
    %v761 = vld [vmem:[%s736 + $0xc0] sm:$0xff]
    %v762 = vld [vmem:[%s736 + $0xc8] sm:$0xff]
    %v763 = vld [vmem:[%s736 + $0xd0] sm:$0xff]
    %v764 = vld [vmem:[%s736 + $0xd8] sm:$0xff]
    %v765 = vld [vmem:[%s736 + $0xe0] sm:$0xff]
    %v766 = vld [vmem:[%s736 + $0xe8] sm:$0xff]
    %v767 = vld [vmem:[%s736 + $0xf0] sm:$0xff]
    %v768 = vld [vmem:[%s736 + $0xf8] sm:$0xff]
    %v769 = vld [vmem:[%s736 + $0x100] sm:$0xff]
    %v770 = vld [vmem:[%s736 + $0x108] sm:$0xff]
    %v771 = vld [vmem:[%s736 + $0x110] sm:$0xff]
    %v772 = vld [vmem:[%s736 + $0x118] sm:$0xff]
    %v773 = vld [vmem:[%s736 + $0x120] sm:$0xff]
    %v774 = vld [vmem:[%s736 + $0x128] sm:$0xff]
    %v775 = vld [vmem:[%s736 + $0x130] sm:$0xff]
    %v776 = vld [vmem:[%s736 + $0x138] sm:$0xff]
    %v777 = vld [vmem:[%s736 + $0x140] sm:$0xff]
    %v778 = vld [vmem:[%s736 + $0x148] sm:$0xff]
    %v779 = vld [vmem:[%s736 + $0x150] sm:$0xff]
    %v780 = vld [vmem:[%s736 + $0x158] sm:$0xff]
    %v781 = vld [vmem:[%s736 + $0x160] sm:$0xff]
    %v782 = vld [vmem:[%s736 + $0x168] sm:$0xff]
    %v783 = vld [vmem:[%s736 + $0x170] sm:$0xff]
    %v784 = vld [vmem:[%s736 + $0x178] sm:$0xff]
    %v785 = vld [vmem:[%s736 + $0x180] sm:$0xff]
    %v786 = vld [vmem:[%s736 + $0x188] sm:$0xff]
    %v787 = vld [vmem:[%s736 + $0x190] sm:$0xff]
    %v788 = vld [vmem:[%s736 + $0x198] sm:$0xff]
    %v789 = vld [vmem:[%s736 + $0x1a0] sm:$0xff]
    %v790 = vld [vmem:[%s736 + $0x1a8] sm:$0xff]
    %v791 = vld [vmem:[%s736 + $0x1b0] sm:$0xff]
    %v792 = vld [vmem:[%s736 + $0x1b8] sm:$0xff]
    %v793 = vld [vmem:[%s736 + $0x1c0] sm:$0xff]
    %v794 = vld [vmem:[%s736 + $0x1c8] sm:$0xff]
    %v795 = vld [vmem:[%s736 + $0x1d0] sm:$0xff]
    %v796 = vld [vmem:[%s736 + $0x1d8] sm:$0xff]
    %v797 = vld [vmem:[%s736 + $0x1e0] sm:$0xff]
    %v798 = vld [vmem:[%s736 + $0x1e8] sm:$0xff]
    %v799 = vld [vmem:[%s736 + $0x1f0] sm:$0xff]
    %v800 = vld [vmem:[%s736 + $0x1f8] sm:$0xff]
    %801 = vmatpush.msra.mxu0 %v767
    %802 = vmatpush.msra.mxu0 %v765
    %803 = vmatpush.msra.mxu0 %v763
    %804 = vmatpush.msra.mxu0 %v761
    %805 = vmatpush.msra.mxu0 %v759
    %806 = vmatpush.msra.mxu0 %v757
    %807 = vmatpush.msra.mxu0 %v755
    %808 = vmatpush.msra.mxu0 %v753
    %809 = vmatpush.msra.mxu0 %v751
    %810 = vmatpush.msra.mxu0 %v749
    %811 = vmatpush.msra.mxu0 %v747
    %812 = vmatpush.msra.mxu0 %v745
    %813 = vmatpush.msra.mxu0 %v743
    %814 = vmatpush.msra.mxu0 %v741
    %815 = vmatpush.msra.mxu0 %v739
    %816 = vmatpush.msra.mxu0 %v737
    %817 = vmatmul.f32.gmra.mxu0 %v265
    %v818 = vpop.f32.mrf.mxu0
    %v819 = vadd.f32 0.0, %v818
    %820 = vdwg.mxu0
    %821 = vmatpush.msra.mxu0 %v799
    %822 = vmatpush.msra.mxu0 %v797
    %823 = vmatpush.msra.mxu0 %v795
    %824 = vmatpush.msra.mxu0 %v793
    %825 = vmatpush.msra.mxu0 %v791
    %826 = vmatpush.msra.mxu0 %v789
    %827 = vmatpush.msra.mxu0 %v787
    %828 = vmatpush.msra.mxu0 %v785
    %829 = vmatpush.msra.mxu0 %v783
    %830 = vmatpush.msra.mxu0 %v781
    %831 = vmatpush.msra.mxu0 %v779
    %832 = vmatpush.msra.mxu0 %v777
    %833 = vmatpush.msra.mxu0 %v775
    %834 = vmatpush.msra.mxu0 %v773
    %835 = vmatpush.msra.mxu0 %v771
    %836 = vmatpush.msra.mxu0 %v769
    %837 = vmatmul.f32.gmra.mxu0 %v294
    %v838 = vpop.f32.mrf.mxu0
    %v839 = vadd.f32 %v819, %v838
    %840 = vdwg.mxu0
    %841 = vmatpush.msra.mxu0 %v768
    %842 = vmatpush.msra.mxu0 %v766
    %843 = vmatpush.msra.mxu0 %v764
    %844 = vmatpush.msra.mxu0 %v762
    %845 = vmatpush.msra.mxu0 %v760
    %846 = vmatpush.msra.mxu0 %v758
    %847 = vmatpush.msra.mxu0 %v756
    %848 = vmatpush.msra.mxu0 %v754
    %849 = vmatpush.msra.mxu0 %v752
    %850 = vmatpush.msra.mxu0 %v750
    %851 = vmatpush.msra.mxu0 %v748
    %852 = vmatpush.msra.mxu0 %v746
    %853 = vmatpush.msra.mxu0 %v744
    %854 = vmatpush.msra.mxu0 %v742
    %855 = vmatpush.msra.mxu0 %v740
    %856 = vmatpush.msra.mxu0 %v738
    %857 = vmatmul.f32.gmra.mxu0 %v265
    %v858 = vpop.f32.mrf.mxu0
    %v859 = vadd.f32 0.0, %v858
    %860 = vdwg.mxu0
    %861 = vmatpush.msra.mxu0 %v800
    %862 = vmatpush.msra.mxu0 %v798
    %863 = vmatpush.msra.mxu0 %v796
    %864 = vmatpush.msra.mxu0 %v794
    %865 = vmatpush.msra.mxu0 %v792
    %866 = vmatpush.msra.mxu0 %v790
    %867 = vmatpush.msra.mxu0 %v788
    %868 = vmatpush.msra.mxu0 %v786
    %869 = vmatpush.msra.mxu0 %v784
    %870 = vmatpush.msra.mxu0 %v782
    %871 = vmatpush.msra.mxu0 %v780
    %872 = vmatpush.msra.mxu0 %v778
    %873 = vmatpush.msra.mxu0 %v776
    %874 = vmatpush.msra.mxu0 %v774
    %875 = vmatpush.msra.mxu0 %v772
    %876 = vmatpush.msra.mxu0 %v770
    %877 = vmatmul.f32.gmra.mxu0 %v294
    %v878 = vpop.f32.mrf.mxu0
    %v879 = vadd.f32 %v859, %v878
    %880 = vdwg.mxu0
    %v881 = vadd.f32 %v734, %v839
    %v882 = vadd.f32 %v735, %v879
    %v883 = vld [vmem:[%s6] sm:$0xff]
    %vm884 = vcmask 64512
    %v886 = vsel %vm884, %v883, 0
    %888 = vmatpush.msra.mxu0 0.0
    %889 = vmatpush.msra.mxu0 0.0
    %890 = vmatpush.msra.mxu0 0.0
    %891 = vmatpush.msra.mxu0 0.0
    %892 = vmatpush.msra.mxu0 0.0
    %893 = vmatpush.msra.mxu0 0.0
    %894 = vmatpush.msra.mxu0 0.0
    %895 = vmatpush.msra.mxu0 0.0
    %896 = vmatpush.msra.mxu0 0.0
    %897 = vmatpush.msra.mxu0 0.0
    %898 = vmatpush.msra.mxu0 0.0
    %899 = vmatpush.msra.mxu0 0.0
    %900 = vmatpush.msra.mxu0 0.0
    %901 = vmatpush.msra.mxu0 0.0
    %902 = vmatpush.msra.mxu0 0.0
    %903 = vmatpush.msra.mxu0 %v882
    %904 = vmatmul.f32.gmra.mxu0 %v886
    %v905 = vpop.f32.mrf.mxu0
    %v906 = vadd.f32 0.0, %v905
    %907 = vdwg.mxu0
    %v908 = vadd.f32 %v881, %v906
    %v909 = vld [vmem:[%s7] sm:$0xff]
    %v910 = vmul.f32 %v908, %v909
    %911 = vst [vmem:[#allocation8] sm:$0xff] %v910
    // Predicated region
    $region42: #{tpu_custom_call.1} parent=1 // pred_check
      _
    $region43: #{tpu_custom_call.1} parent=1 // pred_check_branch
      %913 = sbr.rel (0) target = $region45
    $region44: #{tpu_custom_call.1} parent=1 // pred_region
      %915 = vsyncadd [#allocation5], 0
      %s917 = sshll.u32 [#allocation8], 4
      %s918 = int_to_ptr.vmem [resolvable:$true] %s917
      %s919 = sshll.u32 %s8, 4
      %s920 = int_to_ptr.hbm [resolvable:$true] %s919
      %922 = dma.vmem_to_hbm [thread:$0]  %s918, 128, %s920, [#allocation5]
    $region45: #{tpu_custom_call.1} parent=1 // pred_fallthru
      _
    // Predicated region
    $region46: #{tpu_custom_call.1} parent=1 // pred_check
      _
    $region47: #{tpu_custom_call.1} parent=1 // pred_check_branch
      %924 = sbr.rel (0) target = $region49
    $region48: #{tpu_custom_call.1} parent=1 // pred_region
      %926 = dma.done [#allocation5], 128
    $region49: #{tpu_custom_call.1} parent=1 // pred_fallthru
      _
    %927 = vsyncpa [#allocation4], 1
    %928 = vsyncpa [#allocation7], 1
    %929 = vsyncpa [#allocation5], 1

</llo_original>
